<compile_context>
chip_gen: v7x
topology: tpu7x:2x2x1
jax: 0.10.0
libtpu: 0.0.40
codegen_flags: <defaults>
</compile_context>

<pallas_src>
import numpy as np
import jax
import jax.numpy as jnp
from jax import lax
from jax.experimental import pallas as pl
from jax.experimental.pallas import tpu as pltpu

# ----------------------------------------------------------------------------
# Static configuration (cfg.lips): 43 deterministic lip-landmark indices.
# (Synthetic stand-in for config.yaml — 40 standard MediaPipe lip indices + 3.)
LIPS = [
    61, 185, 40, 39, 37, 0, 267, 269, 270, 409,
    291, 146, 91, 181, 84, 17, 314, 405, 321, 375,
    78, 191, 80, 81, 82, 13, 312, 311, 310, 415,
    95, 88, 178, 87, 14, 317, 402, 318, 324, 308,
    76, 62, 96,
]
assert len(LIPS) == 43

LANE_PACK = 256                       # packed lane width (236 real + 20 pad)
N_FEAT_LANES = 236                    # 86 lips + 42 lh + 66 pose + 42 rh
FEAT_LEN = 2 * N_FEAT_LANES           # 472
LH_LO, LH_HI = 86, 128                # left-hand lanes in the packed layout
RH_LO, RH_HI = 194, 236               # right-hand lanes in the packed layout
MAX_T_TILE = 4096                     # ~8 MiB double-buffered input VMEM


def _round_up(n, m):
    return ((n + m - 1) // m) * m


def _build_col_idx():
    # Column indices into x.reshape(T, 543*3): (x, y) of each landmark, in the
    # exact order the torch module concatenates groups.
    cols = []
    for l in LIPS:
        cols += [3 * l, 3 * l + 1]
    for l in range(468, 489):             # left hand
        cols += [3 * l, 3 * l + 1]
    for l in range(489, 522):             # pose
        cols += [3 * l, 3 * l + 1]
    for l in range(522, 543):             # right hand
        cols += [3 * l, 3 * l + 1]
    assert len(cols) == N_FEAT_LANES
    cols += [0] * (LANE_PACK - N_FEAT_LANES)      # pad lanes (never read back)
    return np.asarray(cols, dtype=np.int32)


COL_IDX = _build_col_idx()


def _build_hand_selector():
    # sel[i, j] = 1 iff lanes i and j belong to the same hand group.
    lane = np.arange(LANE_PACK)
    is_lh = (lane >= LH_LO) & (lane < LH_HI)
    is_rh = (lane >= RH_LO) & (lane < RH_HI)
    sel = np.outer(is_lh, is_lh) | np.outer(is_rh, is_rh)
    return sel.astype(np.float32)


HAND_SEL = _build_hand_selector()


# ----------------------------------------------------------------------------
# Pallas kernel: streaming single-pass per-lane count / sum / sum-of-squares,
# finalize to mean / unbiased std with NaN -> 0.
def _make_kernel(t_total, needs_row_mask):
    def kernel(x_ref, sel_ref, o_ref, acc_ref):
        step = pl.program_id(0)
        t_tile = x_ref.shape[0]

        @pl.when(step == 0)
        def _init():
            acc_ref[...] = jnp.zeros_like(acc_ref)
            o_ref[...] = jnp.zeros_like(o_ref)

        x = x_ref[...]                                        # (t_tile, 256) f32
        # Hand NaN-row probe on the MXU: 0/1 NaN indicator @ same-group selector.
        # probe[t, j] = #NaNs in lane-j's hand group for frame t (0 on non-hand
        # lanes), so (probe == 0) is exactly the per-lane validity wrt hands.
        nan_ind = jnp.isnan(x).astype(jnp.bfloat16)
        probe = jnp.dot(nan_ind, sel_ref[...],
                        preferred_element_type=jnp.float32)   # (t_tile, 256)
        valid = probe == 0.0
        if needs_row_mask:                                    # trace-time switch
            row = lax.broadcasted_iota(jnp.int32, (t_tile, 1), 0) + step * t_tile
            valid = jnp.logical_and(valid, row < t_total)
        # Lips / pose lanes stay "valid" even when NaN -> NaNs propagate into
        # the sums and get zeroed in finalize (matches torch semantics).
        xc = jnp.where(valid, x, 0.0)
        acc_ref[0:1, :] += jnp.sum(valid.astype(jnp.float32), axis=0, keepdims=True)
        acc_ref[1:2, :] += jnp.sum(xc, axis=0, keepdims=True)
        acc_ref[2:3, :] += jnp.sum(xc * xc, axis=0, keepdims=True)

        @pl.when(step == pl.num_programs(0) - 1)
        def _finalize():
            cnt = acc_ref[0:1, :]                             # (1, 256)
            s = acc_ref[1:2, :]
            q = acc_ref[2:3, :]
            safe_n = jnp.maximum(cnt, 1.0)
            # count==0 -> mean 0; count<=1 -> std 0 (torch NaN -> 0 behavior).
            mean = jnp.where(cnt > 0.0, s / safe_n, 0.0)
            var = jnp.where(
                cnt > 1.0,
                (q - s * (s / safe_n)) / jnp.maximum(cnt - 1.0, 1.0),
                0.0)
            std = jnp.sqrt(jnp.maximum(var, 0.0))
            # NaN lips/pose values propagate to here -> 0, as in torch.
            o_ref[0:1, :] = jnp.where(jnp.isnan(mean), 0.0, mean)
            o_ref[1:2, :] = jnp.where(jnp.isnan(std), 0.0, std)

    return kernel


# ----------------------------------------------------------------------------
def feature_gen(x, t_tile=None):
    """Pallas implementation of FeatureGen.forward. x: (T, 543, 3) -> (472,) f32."""
    T = x.shape[0]
    # Single static gather producing the packed lane-dense operand (T, 256).
    packed = x.reshape(T, 543 * 3)[:, COL_IDX].astype(jnp.float32)
    sel = jnp.asarray(HAND_SEL, dtype=jnp.bfloat16)

    if t_tile is None:
        t_tile = min(T, MAX_T_TILE)                  # single tile for typical T
    t_tile = max(8, _round_up(int(t_tile), 8))
    grid = (pl.cdiv(T, t_tile),)
    needs_row_mask = (T % t_tile) != 0               # static

    cost = pl.CostEstimate(
        flops=2 * T * LANE_PACK * LANE_PACK + 12 * T * LANE_PACK,
        transcendentals=0,
        bytes_accessed=T * LANE_PACK * 4 + LANE_PACK * LANE_PACK * 2 + 8 * LANE_PACK * 4,
    )

    out = pl.pallas_call(
        _make_kernel(T, needs_row_mask),
        out_shape=jax.ShapeDtypeStruct((8, LANE_PACK), jnp.float32),
        grid=grid,
        in_specs=[
            pl.BlockSpec((t_tile, LANE_PACK), lambda i: (i, 0)),
            pl.BlockSpec((LANE_PACK, LANE_PACK), lambda i: (0, 0)),
        ],
        out_specs=pl.BlockSpec((8, LANE_PACK), lambda i: (0, 0)),
        scratch_shapes=[pltpu.VMEM((8, LANE_PACK), jnp.float32)],
        compiler_params=pltpu.CompilerParams(
            dimension_semantics=("arbitrary",)),
        cost_estimate=cost,
    )(packed, sel)

    # Row 0 = 236 means, row 1 = 236 stds  ->  [x1m..x4m, x1s..x4s] = (472,)
    return out[0:2, 0:N_FEAT_LANES].reshape(FEAT_LEN)


# ----------------------------------------------------------------------------
# Pure-JAX reference (mirrors the PyTorch semantics) for sanity checks.
def feature_gen_ref(x):
    x2 = x[:, :, :2].astype(jnp.float32)
    T = x2.shape[0]
    lips = x2[:, jnp.asarray(LIPS), :].reshape(T, 86)
    lefth = x2[:, 468:489, :].reshape(T, 42)
    pose = x2[:, 489:522, :].reshape(T, 66)
    righth = x2[:, 522:543, :].reshape(T, 42)
    lefth = lefth[~jnp.any(jnp.isnan(lefth), axis=1)]
    righth = righth[~jnp.any(jnp.isnan(righth), axis=1)]
    feat = jnp.concatenate(
        [jnp.mean(lips, 0), jnp.mean(lefth, 0), jnp.mean(pose, 0), jnp.mean(righth, 0),
         jnp.std(lips, axis=0, ddof=1), jnp.std(lefth, axis=0, ddof=1),
         jnp.std(pose, axis=0, ddof=1), jnp.std(righth, axis=0, ddof=1)], axis=0)
    return jnp.where(jnp.isnan(feat), 0.0, feat)


# ----------------------------------------------------------------------------
if __name__ == "__main__":
    fg = jax.jit(feature_gen, static_argnames=("t_tile",))

    # --- small case (T = 8): single full tile, no row mask --------------------
    T = 8
    x = jax.random.normal(jax.random.PRNGKey(0), (T, 543, 3), dtype=jnp.float32)
    x = x.at[1, 468:489, :].set(jnp.nan)   # left hand missing in frame 1
    x = x.at[5, 468:489, :].set(jnp.nan)   # left hand missing in frame 5
    x = x.at[3, 522:543, :].set(jnp.nan)   # right hand missing in frame 3
    feat = jax.block_until_ready(fg(x))
    assert feat.shape == (FEAT_LEN,) and feat.dtype == jnp.float32
    np.testing.assert_allclose(np.asarray(feat), np.asarray(feature_gen_ref(x)),
                               rtol=1e-4, atol=1e-5)

    # --- T = 200: single-tile default, and streaming grid with partial tile ---
    T2 = 200
    x2 = jax.random.normal(jax.random.PRNGKey(1), (T2, 543, 3), dtype=jnp.float32)
    x2 = x2.at[7, 468:489, :].set(jnp.nan)     # missing left hand
    x2 = x2.at[19, 522:543, :].set(jnp.nan)    # missing right hand
    x2 = x2.at[120, 522:543, :].set(jnp.nan)   # missing right hand
    x2 = x2.at[50, 61, 0].set(jnp.nan)         # single NaN lip coord -> 0 feature
    ref2 = np.asarray(feature_gen_ref(x2))
    np.testing.assert_allclose(np.asarray(jax.block_until_ready(fg(x2))),
                               ref2, rtol=1e-4, atol=1e-5)
    np.testing.assert_allclose(np.asarray(jax.block_until_ready(fg(x2, t_tile=64))),
                               ref2, rtol=1e-4, atol=1e-5)   # grid=4, partial last tile

    # --- T = 13: non-multiple-of-8, single padded tile with row mask ----------
    T3 = 13
    x3 = jax.random.normal(jax.random.PRNGKey(2), (T3, 543, 3), dtype=jnp.float32)
    x3 = x3.at[2, 468:489, :].set(jnp.nan)
    np.testing.assert_allclose(np.asarray(jax.block_until_ready(fg(x3))),
                               np.asarray(feature_gen_ref(x3)), rtol=1e-4, atol=1e-5)

    print("KERNEL_OK")
</pallas_src>

<mosaic_0001>
module attributes {stable_mosaic.version = 11 : i64} {
  func.func @kernel(%arg0: i32, %arg1: memref<8x256xf32, #tpu.memory_space<vmem>>, %arg2: memref<256x256xbf16, #tpu.memory_space<vmem>>, %arg3: memref<8x256xf32, #tpu.memory_space<vmem>>, %arg4: memref<8x256xf32, #tpu.memory_space<vmem>>) attributes {dimension_semantics = [#tpu.dimension_semantics<arbitrary>], iteration_bounds = array<i64: 1>, scalar_prefetch = 0 : i64, scratch_operands = 1 : i64, tpu.core_type = #tpu.core_type<tc>, window_params = [{transform_indices = @transform_0, window_bounds = array<i64: 8, 256>}, {pipeline_mode = #tpu.pipeline_mode<synchronous>, transform_indices = @transform_1, window_bounds = array<i64: 256, 256>}, {pipeline_mode = #tpu.pipeline_mode<synchronous>, transform_indices = @transform_2, window_bounds = array<i64: 8, 256>}]} {
    %c0_i32 = arith.constant 0 : i32
    %0 = arith.cmpi eq, %arg0, %c0_i32 : i32
    %1 = arith.extui %0 : i1 to i32
    %c0_i32_0 = arith.constant 0 : i32
    %2 = arith.cmpi ne, %1, %c0_i32_0 : i32
    scf.if %2 {
      %cst_21 = arith.constant 0.000000e+00 : f32
      %35 = vector.broadcast %cst_21 : f32 to vector<8x256xf32>
      %c0_22 = arith.constant 0 : index
      %c0_23 = arith.constant 0 : index
      %36 = vector.load %arg4[%c0_22, %c0_23] : memref<8x256xf32, #tpu.memory_space<vmem>>, vector<8x256xf32>
      tpu.vector_store %arg4[%c0_22, %c0_23], %35 {strides = array<i32>} : memref<8x256xf32, #tpu.memory_space<vmem>>, vector<8x256xf32>,
      %cst_24 = arith.constant 0.000000e+00 : f32
      %37 = vector.broadcast %cst_24 : f32 to vector<8x256xf32>
      %c0_25 = arith.constant 0 : index
      %c0_26 = arith.constant 0 : index
      %38 = vector.load %arg3[%c0_25, %c0_26] : memref<8x256xf32, #tpu.memory_space<vmem>>, vector<8x256xf32>
      tpu.vector_store %arg3[%c0_25, %c0_26], %37 {strides = array<i32>} : memref<8x256xf32, #tpu.memory_space<vmem>>, vector<8x256xf32>,
    } else {
    }
    %c0 = arith.constant 0 : index
    %c0_1 = arith.constant 0 : index
    %3 = vector.load %arg1[%c0, %c0_1] : memref<8x256xf32, #tpu.memory_space<vmem>>, vector<8x256xf32>
    %4 = arith.cmpf one, %3, %3 : vector<8x256xf32>
    %5 = arith.extui %4 : vector<8x256xi1> to vector<8x256xi32>
    %6 = arith.sitofp %5 : vector<8x256xi32> to vector<8x256xf32>
    %7 = arith.truncf %6 : vector<8x256xf32> to vector<8x256xbf16>
    %c0_2 = arith.constant 0 : index
    %c0_3 = arith.constant 0 : index
    %8 = vector.load %arg2[%c0_2, %c0_3] : memref<256x256xbf16, #tpu.memory_space<vmem>>, vector<256x256xbf16>
    %cst = arith.constant dense<0.000000e+00> : vector<8x256xf32>
    %9 = tpu.matmul %7, %8, %cst {dimension_numbers = #tpu.dot_dimension_numbers<[1], [0], [0], [1], [0, 0, 1, 1], [], []>} : vector<8x256xbf16>, vector<256x256xbf16>, vector<8x256xf32> -> vector<8x256xf32>
    %cst_4 = arith.constant 0.000000e+00 : f32
    %10 = vector.broadcast %cst_4 : f32 to vector<8x256xf32>
    %11 = arith.cmpf oeq, %9, %10 : vector<8x256xf32>
    %cst_5 = arith.constant 0.000000e+00 : f32
    %12 = vector.broadcast %cst_5 : f32 to vector<8x256xf32>
    %13 = arith.select %11, %3, %12 : vector<8x256xi1>, vector<8x256xf32>
    %c0_6 = arith.constant 0 : index
    %c0_7 = arith.constant 0 : index
    %14 = vector.load %arg4[%c0_6, %c0_7] : memref<8x256xf32, #tpu.memory_space<vmem>>, vector<1x256xf32>
    %15 = arith.extui %11 : vector<8x256xi1> to vector<8x256xi32>
    %16 = arith.sitofp %15 : vector<8x256xi32> to vector<8x256xf32>
    %cst_8 = arith.constant dense<0.000000e+00> : vector<256xf32>
    %17 = vector.multi_reduction <add>, %16, %cst_8 [0] : vector<8x256xf32> to vector<256xf32>
    %18 = vector.shape_cast %17 : vector<256xf32> to vector<1x256xf32>
    %19 = arith.addf %14, %18 : vector<1x256xf32>
    %c0_9 = arith.constant 0 : index
    %c0_10 = arith.constant 0 : index
    %20 = vector.load %arg4[%c0_9, %c0_10] : memref<8x256xf32, #tpu.memory_space<vmem>>, vector<1x256xf32>
    tpu.vector_store %arg4[%c0_9, %c0_10], %19 {strides = array<i32>} : memref<8x256xf32, #tpu.memory_space<vmem>>, vector<1x256xf32>,
    %c1 = arith.constant 1 : index
    %c0_11 = arith.constant 0 : index
    %21 = vector.load %arg4[%c1, %c0_11] : memref<8x256xf32, #tpu.memory_space<vmem>>, vector<1x256xf32>
    %cst_12 = arith.constant dense<0.000000e+00> : vector<256xf32>
    %22 = vector.multi_reduction <add>, %13, %cst_12 [0] : vector<8x256xf32> to vector<256xf32>
    %23 = vector.shape_cast %22 : vector<256xf32> to vector<1x256xf32>
    %24 = arith.addf %21, %23 : vector<1x256xf32>
    %c1_13 = arith.constant 1 : index
    %c0_14 = arith.constant 0 : index
    %25 = vector.load %arg4[%c1_13, %c0_14] : memref<8x256xf32, #tpu.memory_space<vmem>>, vector<1x256xf32>
    tpu.vector_store %arg4[%c1_13, %c0_14], %24 {strides = array<i32>} : memref<8x256xf32, #tpu.memory_space<vmem>>, vector<1x256xf32>,
    %c2 = arith.constant 2 : index
    %c0_15 = arith.constant 0 : index
    %26 = vector.load %arg4[%c2, %c0_15] : memref<8x256xf32, #tpu.memory_space<vmem>>, vector<1x256xf32>
    %27 = arith.mulf %13, %13 : vector<8x256xf32>
    %cst_16 = arith.constant dense<0.000000e+00> : vector<256xf32>
    %28 = vector.multi_reduction <add>, %27, %cst_16 [0] : vector<8x256xf32> to vector<256xf32>
    %29 = vector.shape_cast %28 : vector<256xf32> to vector<1x256xf32>
    %30 = arith.addf %26, %29 : vector<1x256xf32>
    %c2_17 = arith.constant 2 : index
    %c0_18 = arith.constant 0 : index
    %31 = vector.load %arg4[%c2_17, %c0_18] : memref<8x256xf32, #tpu.memory_space<vmem>>, vector<1x256xf32>
    tpu.vector_store %arg4[%c2_17, %c0_18], %30 {strides = array<i32>} : memref<8x256xf32, #tpu.memory_space<vmem>>, vector<1x256xf32>,
    %c0_i32_19 = arith.constant 0 : i32
    %32 = arith.cmpi eq, %arg0, %c0_i32_19 : i32
    %33 = arith.extui %32 : i1 to i32
    %c0_i32_20 = arith.constant 0 : i32
    %34 = arith.cmpi ne, %33, %c0_i32_20 : i32
    scf.if %34 {
      %c0_21 = arith.constant 0 : index
      %c0_22 = arith.constant 0 : index
      %35 = vector.load %arg4[%c0_21, %c0_22] : memref<8x256xf32, #tpu.memory_space<vmem>>, vector<1x256xf32>
      %c1_23 = arith.constant 1 : index
      %c0_24 = arith.constant 0 : index
      %36 = vector.load %arg4[%c1_23, %c0_24] : memref<8x256xf32, #tpu.memory_space<vmem>>, vector<1x256xf32>
      %c2_25 = arith.constant 2 : index
      %c0_26 = arith.constant 0 : index
      %37 = vector.load %arg4[%c2_25, %c0_26] : memref<8x256xf32, #tpu.memory_space<vmem>>, vector<1x256xf32>
      %cst_27 = arith.constant 1.000000e+00 : f32
      %38 = vector.broadcast %cst_27 : f32 to vector<1x256xf32>
      %39 = arith.maximumf %35, %38 : vector<1x256xf32>
      %cst_28 = arith.constant 0.000000e+00 : f32
      %40 = vector.broadcast %cst_28 : f32 to vector<1x256xf32>
      %41 = arith.cmpf ogt, %35, %40 : vector<1x256xf32>
      %42 = arith.divf %36, %39 : vector<1x256xf32>
      %cst_29 = arith.constant 0.000000e+00 : f32
      %43 = vector.broadcast %cst_29 : f32 to vector<1x256xf32>
      %44 = arith.select %41, %42, %43 : vector<1x256xi1>, vector<1x256xf32>
      %cst_30 = arith.constant 1.000000e+00 : f32
      %45 = vector.broadcast %cst_30 : f32 to vector<1x256xf32>
      %46 = arith.cmpf ogt, %35, %45 : vector<1x256xf32>
      %47 = arith.divf %36, %39 : vector<1x256xf32>
      %48 = arith.mulf %36, %47 : vector<1x256xf32>
      %49 = arith.subf %37, %48 : vector<1x256xf32>
      %cst_31 = arith.constant 1.000000e+00 : f32
      %50 = vector.broadcast %cst_31 : f32 to vector<1x256xf32>
      %51 = arith.subf %35, %50 : vector<1x256xf32>
      %cst_32 = arith.constant 1.000000e+00 : f32
      %52 = vector.broadcast %cst_32 : f32 to vector<1x256xf32>
      %53 = arith.maximumf %51, %52 : vector<1x256xf32>
      %54 = arith.divf %49, %53 : vector<1x256xf32>
      %cst_33 = arith.constant 0.000000e+00 : f32
      %55 = vector.broadcast %cst_33 : f32 to vector<1x256xf32>
      %56 = arith.select %46, %54, %55 : vector<1x256xi1>, vector<1x256xf32>
      %cst_34 = arith.constant 0.000000e+00 : f32
      %57 = vector.broadcast %cst_34 : f32 to vector<1x256xf32>
      %58 = arith.maximumf %56, %57 : vector<1x256xf32>
      %59 = math.sqrt %58 : vector<1x256xf32>
      %60 = arith.cmpf one, %44, %44 : vector<1x256xf32>
      %cst_35 = arith.constant 0.000000e+00 : f32
      %61 = vector.broadcast %cst_35 : f32 to vector<1x256xf32>
      %62 = arith.select %60, %61, %44 : vector<1x256xi1>, vector<1x256xf32>
      %c0_36 = arith.constant 0 : index
      %c0_37 = arith.constant 0 : index
      %63 = vector.load %arg3[%c0_36, %c0_37] : memref<8x256xf32, #tpu.memory_space<vmem>>, vector<1x256xf32>
      tpu.vector_store %arg3[%c0_36, %c0_37], %62 {strides = array<i32>} : memref<8x256xf32, #tpu.memory_space<vmem>>, vector<1x256xf32>,
      %64 = arith.cmpf one, %59, %59 : vector<1x256xf32>
      %cst_38 = arith.constant 0.000000e+00 : f32
      %65 = vector.broadcast %cst_38 : f32 to vector<1x256xf32>
      %66 = arith.select %64, %65, %59 : vector<1x256xi1>, vector<1x256xf32>
      %c1_39 = arith.constant 1 : index
      %c0_40 = arith.constant 0 : index
      %67 = vector.load %arg3[%c1_39, %c0_40] : memref<8x256xf32, #tpu.memory_space<vmem>>, vector<1x256xf32>
      tpu.vector_store %arg3[%c1_39, %c0_40], %66 {strides = array<i32>} : memref<8x256xf32, #tpu.memory_space<vmem>>, vector<1x256xf32>,
    } else {
    }
    return
  }
  func.func @transform_0(%arg0: i32) -> (i32, i32) {
    %c0_i32 = arith.constant 0 : i32
    %c0_i32_0 = arith.constant 0 : i32
    return %arg0, %c0_i32 : i32, i32
  }
  func.func @transform_1(%arg0: i32) -> (i32, i32) {
    %c0_i32 = arith.constant 0 : i32
    %c0_i32_0 = arith.constant 0 : i32
    %c0_i32_1 = arith.constant 0 : i32
    return %c0_i32, %c0_i32_0 : i32, i32
  }
  func.func @transform_2(%arg0: i32) -> (i32, i32) {
    %c0_i32 = arith.constant 0 : i32
    %c0_i32_0 = arith.constant 0 : i32
    %c0_i32_1 = arith.constant 0 : i32
    return %c0_i32, %c0_i32_0 : i32, i32
  }
}

</mosaic_0001>

<llo_original>
// kernel: feature_gen.1
$region0: #{feature_gen.1}
  #allocation0 [shape = 'u32[]', space=smem, size = 0x4, offset = 0x4, fixed_abs, tag = 'smem constant byte address 0x4 - core index']
  #allocation1 [shape = 'u32[144,128]{1,0:T(1,128)}', space=vmem, size = 0x12000, scoped, tag = 'internal scratch']
  #allocation2 [shape = 'f32[8,256]{1,0:T(8,128)}', space=vmem, size = 0x2000, scoped, tag = 'scratch operand']
  %s0 = inlined_call_operand.vmem [shape: f32[8,256], index: 0, kind: input, shape index: {}]
  %s1 = inlined_call_operand.vmem [shape: bf16[256,256], index: 1, kind: input, shape index: {}]
  %s2 = inlined_call_operand.vmem [shape: f32[8,256], index: 2, kind: output, shape index: {}]
  %s3 = sld [smem:[#allocation0]]
  $region26: #{feature_gen.1} parent=0
    _
  %s5 = ssub.s32 1, %s3
  %s6 = scalar_select 0, %s5, %s3
  // Predicated region
  $region2: #{feature_gen.1} parent=0 // pred_check
    _
  $region3: #{feature_gen.1} parent=0 // pred_check_branch
    %8 = sbr.rel (0) target = $region5
  $region4: #{feature_gen.1} parent=0 // pred_region
    _
  $region5: #{feature_gen.1} parent=0 // pred_fallthru
    _
  // Predicated region
  $region6: #{feature_gen.1} parent=0 // pred_check
    _
  $region7: #{feature_gen.1} parent=0 // pred_check_branch
    %10 = sbr.rel (0) target = $region9
  $region8: #{feature_gen.1} parent=0 // pred_region
    _
  $region9: #{feature_gen.1} parent=0 // pred_fallthru
    _
  %p11 = scmp.eq.s32.totalorder 0, 0
  // Predicated region
  $region10: #{feature_gen.1} parent=0 // pred_check
    %p12 = pneg %p11
  $region11: #{feature_gen.1} parent=0 // pred_check_branch
    %14 = sbr.rel (%p12) target = $region13
  $region12: #{feature_gen.1} parent=0 // pred_region
    %15 = vst [vmem:[#allocation2] sm:$0xff] 0.0
    %16 = vst [vmem:[#allocation2 + $0x8] sm:$0xff] 0.0
    %17 = vst [vmem:[%s2] sm:$0xff] 0.0
    %18 = vst [vmem:[%s2 + $0x8] sm:$0xff] 0.0
  $region13: #{feature_gen.1} parent=0 // pred_fallthru
    _
  %v19 = vld [vmem:[%s0] sm:$0xff]
  %v20 = vld [vmem:[%s0 + $0x8] sm:$0xff]
  %vm21 = vcmp.ne.f32.partialorder %v19, %v19
  %vm22 = vcmp.ne.f32.partialorder %v20, %v20
  %v23 = vsel %vm21, 1, 0
  %v24 = vsel %vm22, 1, 0
  %v25 = vcvt.s32.f32 %v23
  %v26 = vcvt.s32.f32 %v24
  %v27 = vpack.c.bf16 %v25, %v25
  %v28 = vpack.c.bf16 %v26, %v26
  %v29 = vld [vmem:[%s1] sm:$0xff]
  %v30 = vld [vmem:[%s1 + $0x8] sm:$0xff]
  %v31 = vld [vmem:[%s1 + $0x10] sm:$0xff]
  %v32 = vld [vmem:[%s1 + $0x18] sm:$0xff]
  %v33 = vld [vmem:[%s1 + $0x20] sm:$0xff]
  %v34 = vld [vmem:[%s1 + $0x28] sm:$0xff]
  %v35 = vld [vmem:[%s1 + $0x30] sm:$0xff]
  %v36 = vld [vmem:[%s1 + $0x38] sm:$0xff]
  %v37 = vld [vmem:[%s1 + $0x40] sm:$0xff]
  %v38 = vld [vmem:[%s1 + $0x48] sm:$0xff]
  %v39 = vld [vmem:[%s1 + $0x50] sm:$0xff]
  %v40 = vld [vmem:[%s1 + $0x58] sm:$0xff]
  %v41 = vld [vmem:[%s1 + $0x60] sm:$0xff]
  %v42 = vld [vmem:[%s1 + $0x68] sm:$0xff]
  %v43 = vld [vmem:[%s1 + $0x70] sm:$0xff]
  %v44 = vld [vmem:[%s1 + $0x78] sm:$0xff]
  %v45 = vld [vmem:[%s1 + $0x80] sm:$0xff]
  %v46 = vld [vmem:[%s1 + $0x88] sm:$0xff]
  %v47 = vld [vmem:[%s1 + $0x90] sm:$0xff]
  %v48 = vld [vmem:[%s1 + $0x98] sm:$0xff]
  %v49 = vld [vmem:[%s1 + $0xa0] sm:$0xff]
  %v50 = vld [vmem:[%s1 + $0xa8] sm:$0xff]
  %v51 = vld [vmem:[%s1 + $0xb0] sm:$0xff]
  %v52 = vld [vmem:[%s1 + $0xb8] sm:$0xff]
  %v53 = vld [vmem:[%s1 + $0xc0] sm:$0xff]
  %v54 = vld [vmem:[%s1 + $0xc8] sm:$0xff]
  %v55 = vld [vmem:[%s1 + $0xd0] sm:$0xff]
  %v56 = vld [vmem:[%s1 + $0xd8] sm:$0xff]
  %v57 = vld [vmem:[%s1 + $0xe0] sm:$0xff]
  %v58 = vld [vmem:[%s1 + $0xe8] sm:$0xff]
  %v59 = vld [vmem:[%s1 + $0xf0] sm:$0xff]
  %v60 = vld [vmem:[%s1 + $0xf8] sm:$0xff]
  %v93 = vunpack.c.l.b16 %v29
  %v94 = vunpack.c.h.b16 %v29
  %v95 = vunpack.c.l.b16 %v30
  %v96 = vunpack.c.h.b16 %v30
  %v97 = vunpack.c.l.b16 %v31
  %v98 = vunpack.c.h.b16 %v31
  %v99 = vunpack.c.l.b16 %v32
  %v100 = vunpack.c.h.b16 %v32
  %v101 = vunpack.c.l.b16 %v33
  %v102 = vunpack.c.h.b16 %v33
  %v103 = vunpack.c.l.b16 %v34
  %v104 = vunpack.c.h.b16 %v34
  %v105 = vunpack.c.l.b16 %v35
  %v106 = vunpack.c.h.b16 %v35
  %v107 = vunpack.c.l.b16 %v36
  %v108 = vunpack.c.h.b16 %v36
  %v109 = vunpack.c.l.b16 %v37
  %v110 = vunpack.c.h.b16 %v37
  %v111 = vunpack.c.l.b16 %v38
  %v112 = vunpack.c.h.b16 %v38
  %v113 = vunpack.c.l.b16 %v39
  %v114 = vunpack.c.h.b16 %v39
  %v115 = vunpack.c.l.b16 %v40
  %v116 = vunpack.c.h.b16 %v40
  %v117 = vunpack.c.l.b16 %v41
  %v118 = vunpack.c.h.b16 %v41
  %v119 = vunpack.c.l.b16 %v42
  %v120 = vunpack.c.h.b16 %v42
  %v121 = vunpack.c.l.b16 %v43
  %v122 = vunpack.c.h.b16 %v43
  %v123 = vunpack.c.l.b16 %v44
  %v124 = vunpack.c.h.b16 %v44
  %v125 = vunpack.c.l.b16 %v45
  %v126 = vunpack.c.h.b16 %v45
  %v127 = vunpack.c.l.b16 %v46
  %v128 = vunpack.c.h.b16 %v46
  %v129 = vunpack.c.l.b16 %v47
  %v130 = vunpack.c.h.b16 %v47
  %v131 = vunpack.c.l.b16 %v48
  %v132 = vunpack.c.h.b16 %v48
  %v133 = vunpack.c.l.b16 %v49
  %v134 = vunpack.c.h.b16 %v49
  %v135 = vunpack.c.l.b16 %v50
  %v136 = vunpack.c.h.b16 %v50
  %v137 = vunpack.c.l.b16 %v51
  %v138 = vunpack.c.h.b16 %v51
  %v139 = vunpack.c.l.b16 %v52
  %v140 = vunpack.c.h.b16 %v52
  %v141 = vunpack.c.l.b16 %v53
  %v142 = vunpack.c.h.b16 %v53
  %v143 = vunpack.c.l.b16 %v54
  %v144 = vunpack.c.h.b16 %v54
  %v145 = vunpack.c.l.b16 %v55
  %v146 = vunpack.c.h.b16 %v55
  %v147 = vunpack.c.l.b16 %v56
  %v148 = vunpack.c.h.b16 %v56
  %v149 = vunpack.c.l.b16 %v57
  %v150 = vunpack.c.h.b16 %v57
  %v151 = vunpack.c.l.b16 %v58
  %v152 = vunpack.c.h.b16 %v58
  %v153 = vunpack.c.l.b16 %v59
  %v154 = vunpack.c.h.b16 %v59
  %v155 = vunpack.c.l.b16 %v60
  %v156 = vunpack.c.h.b16 %v60
  %v157 = vpack.c.b16 %v95, %v93
  %v158 = vpack.c.b16 %v96, %v94
  %v159 = vpack.c.b16 %v99, %v97
  %v160 = vpack.c.b16 %v100, %v98
  %v161 = vpack.c.b16 %v103, %v101
  %v162 = vpack.c.b16 %v104, %v102
  %v163 = vpack.c.b16 %v107, %v105
  %v164 = vpack.c.b16 %v108, %v106
  %v165 = vpack.c.b16 %v111, %v109
  %v166 = vpack.c.b16 %v112, %v110
  %v167 = vpack.c.b16 %v115, %v113
  %v168 = vpack.c.b16 %v116, %v114
  %v169 = vpack.c.b16 %v119, %v117
  %v170 = vpack.c.b16 %v120, %v118
  %v171 = vpack.c.b16 %v123, %v121
  %v172 = vpack.c.b16 %v124, %v122
  %v173 = vpack.c.b16 %v127, %v125
  %v174 = vpack.c.b16 %v128, %v126
  %v175 = vpack.c.b16 %v131, %v129
  %v176 = vpack.c.b16 %v132, %v130
  %v177 = vpack.c.b16 %v135, %v133
  %v178 = vpack.c.b16 %v136, %v134
  %v179 = vpack.c.b16 %v139, %v137
  %v180 = vpack.c.b16 %v140, %v138
  %v181 = vpack.c.b16 %v143, %v141
  %v182 = vpack.c.b16 %v144, %v142
  %v183 = vpack.c.b16 %v147, %v145
  %v184 = vpack.c.b16 %v148, %v146
  %v185 = vpack.c.b16 %v151, %v149
  %v186 = vpack.c.b16 %v152, %v150
  %v187 = vpack.c.b16 %v155, %v153
  %v188 = vpack.c.b16 %v156, %v154
  %221 = vmatprep.subr.bf16.mxu0 %v158
  %222 = vmatpush1.bf16.msra.mxu0 %v157
  %223 = vmatprep.subr.bf16.mxu0 %v160
  %224 = vmatpush1.bf16.msra.mxu0 %v159
  %225 = vmatprep.subr.bf16.mxu0 %v162
  %226 = vmatpush1.bf16.msra.mxu0 %v161
  %227 = vmatprep.subr.bf16.mxu0 %v164
  %228 = vmatpush1.bf16.msra.mxu0 %v163
  %229 = vmatprep.subr.bf16.mxu0 %v166
  %230 = vmatpush1.bf16.msra.mxu0 %v165
  %231 = vmatprep.subr.bf16.mxu0 %v168
  %232 = vmatpush1.bf16.msra.mxu0 %v167
  %233 = vmatprep.subr.bf16.mxu0 %v170
  %234 = vmatpush1.bf16.msra.mxu0 %v169
  %235 = vmatprep.subr.bf16.mxu0 %v172
  %236 = vmatpush1.bf16.msra.mxu0 %v171
  %237 = vmatprep.subr.bf16.mxu0 %v174
  %238 = vmatpush1.bf16.msra.mxu0 %v173
  %239 = vmatprep.subr.bf16.mxu0 %v176
  %240 = vmatpush1.bf16.msra.mxu0 %v175
  %241 = vmatprep.subr.bf16.mxu0 %v178
  %242 = vmatpush1.bf16.msra.mxu0 %v177
  %243 = vmatprep.subr.bf16.mxu0 %v180
  %244 = vmatpush1.bf16.msra.mxu0 %v179
  %245 = vmatprep.subr.bf16.mxu0 %v182
  %246 = vmatpush1.bf16.msra.mxu0 %v181
  %247 = vmatprep.subr.bf16.mxu0 %v184
  %248 = vmatpush1.bf16.msra.mxu0 %v183
  %249 = vmatprep.subr.bf16.mxu0 %v186
  %250 = vmatpush1.bf16.msra.mxu0 %v185
  %251 = vmatprep.subr.bf16.mxu0 %v188
  %252 = vmatpush1.bf16.msra.mxu0 %v187
  %253 = vmatprep.mubr.bf16.mxu0 %v28
  %254 = vmatmul.mubr.bf16.gmra.mrb[0].mxu0 %v27
  %v255 = vpop.f32.mrb[0].mxu0
  %v256 = vadd.f32 0.0, %v255
  %v257 = vpop.f32.mrb[0].mxu0
  %v258 = vadd.f32 0.0, %v257
  %v259 = vpop.f32.mrb[0].mxu0
  %v260 = vpop.f32.mrb[0].mxu0
  %261 = vdwg.mxu0
  %vm262 = vcmp.eq.f32.partialorder %v256, 0.0
  %vm263 = vcmp.eq.f32.partialorder %v258, 0.0
  %v264 = vsel %vm262, %v19, 0.0
  %v265 = vsel %vm263, %v20, 0.0
  %v266 = vld [vmem:[#allocation2] ss:$8 sm:$0x3]
  %v267 = vsel %vm262, 1, 0
  %v268 = vsel %vm263, 1, 0
  %v269 = vcvt.s32.f32 %v267
  %v270 = vcvt.s32.f32 %v268
  %v271 = vrot.slane %v269, 4
  %v272 = vadd.f32 %v269, %v271
  %v273 = vrot.slane %v272, 2
  %v274 = vadd.f32 %v272, %v273
  %v275 = vrot.slane %v274, 1
  %v276 = vadd.f32 %v274, %v275
  %v277 = vrot.slane %v270, 4
  %v278 = vadd.f32 %v270, %v277
  %v279 = vrot.slane %v278, 2
  %v280 = vadd.f32 %v278, %v279
  %v281 = vrot.slane %v280, 1
  %v282 = vadd.f32 %v280, %v281
  %v285 = vcombine.low %v276, %v282
  %v287 = vunpack.c.l.s4 1966171168
  %v288 = vunpack.c.0.s8 %v287
  %v289 = vlaneseq
  %v290 = vshrl.u32 %v289, 7
  %v291 = vsub.s32 %v288, %v290
  %v292 = vrot.slane %v285, %v291
  %v294 = vunpack.c.l.s4 1966171168
  %v295 = vunpack.c.0.s8 %v294
  %v296 = vlaneseq
  %v297 = vshrl.u32 %v296, 7
  %v298 = vsub.s32 %v295, %v297
  %v299 = vrot.slane %v292, %v298
  %v301 = vadd.f32 %v266, %v299
  %v302 = vlaneseq
  %vm303 = vcmp.ge.s32.totalorder %v302, 0
  %vm304 = vcmp.lt.s32.totalorder %v302, 256
  %vm305 = vmand %vm303, %vm304
  %306 = vst.msk [vmem:[#allocation2] ss:$8 sm:$0x3] %vm305, %v301
  %307 = vst.msk [vmem:[#allocation2] ss:$8 sm:$0x0] %vm305, %v301
  %s308 = scalar_lea.vmem [#allocation2], 1
  %v309 = vld [vmem:[%s308] ss:$8 sm:$0x3]
  %v310 = vrot.slane %v264, 4
  %v311 = vadd.f32 %v264, %v310
  %v312 = vrot.slane %v311, 2
  %v313 = vadd.f32 %v311, %v312
  %v314 = vrot.slane %v313, 1
  %v315 = vadd.f32 %v313, %v314
  %v316 = vrot.slane %v265, 4
  %v317 = vadd.f32 %v265, %v316
  %v318 = vrot.slane %v317, 2
  %v319 = vadd.f32 %v317, %v318
  %v320 = vrot.slane %v319, 1
  %v321 = vadd.f32 %v319, %v320
  %v324 = vcombine.low %v315, %v321
  %v326 = vunpack.c.l.s4 1966171168
  %v327 = vunpack.c.0.s8 %v326
  %v328 = vlaneseq
  %v329 = vshrl.u32 %v328, 7
  %v330 = vsub.s32 %v327, %v329
  %v331 = vrot.slane %v324, %v330
  %v333 = vunpack.c.l.s4 1966171168
  %v334 = vunpack.c.0.s8 %v333
  %v335 = vlaneseq
  %v336 = vshrl.u32 %v335, 7
  %v337 = vsub.s32 %v334, %v336
  %v338 = vrot.slane %v331, %v337
  %v340 = vadd.f32 %v309, %v338
  %341 = vst.msk [vmem:[%s308] ss:$8 sm:$0x3] %vm305, %v340
  %342 = vst.msk [vmem:[%s308] ss:$8 sm:$0x0] %vm305, %v340
  %s343 = scalar_lea.vmem [#allocation2], 2
  %v344 = vld [vmem:[%s343] ss:$8 sm:$0x3]
  %v345 = vmul.f32 %v264, %v264
  %v346 = vmul.f32 %v265, %v265
  %v347 = vrot.slane %v345, 4
  %v348 = vadd.f32 %v345, %v347
  %v349 = vrot.slane %v348, 2
  %v350 = vadd.f32 %v348, %v349
  %v351 = vrot.slane %v350, 1
  %v352 = vadd.f32 %v350, %v351
  %v353 = vrot.slane %v346, 4
  %v354 = vadd.f32 %v346, %v353
  %v355 = vrot.slane %v354, 2
  %v356 = vadd.f32 %v354, %v355
  %v357 = vrot.slane %v356, 1
  %v358 = vadd.f32 %v356, %v357
  %v361 = vcombine.low %v352, %v358
  %v363 = vunpack.c.l.s4 1966171168
  %v364 = vunpack.c.0.s8 %v363
  %v365 = vlaneseq
  %v366 = vshrl.u32 %v365, 7
  %v367 = vsub.s32 %v364, %v366
  %v368 = vrot.slane %v361, %v367
  %v370 = vunpack.c.l.s4 1966171168
  %v371 = vunpack.c.0.s8 %v370
  %v372 = vlaneseq
  %v373 = vshrl.u32 %v372, 7
  %v374 = vsub.s32 %v371, %v373
  %v375 = vrot.slane %v368, %v374
  %v377 = vadd.f32 %v344, %v375
  %378 = vst.msk [vmem:[%s343] ss:$8 sm:$0x3] %vm305, %v377
  %379 = vst.msk [vmem:[%s343] ss:$8 sm:$0x0] %vm305, %v377
  // Predicated region
  $region14: #{feature_gen.1} parent=0 // pred_check
    %p380 = pneg %p11
  $region15: #{feature_gen.1} parent=0 // pred_check_branch
    %382 = sbr.rel (%p380) target = $region17
  $region16: #{feature_gen.1} parent=0 // pred_region
    %v383 = vld [vmem:[#allocation2] ss:$8 sm:$0x3]
    %v384 = vld [vmem:[%s308] ss:$8 sm:$0x3]
    %v385 = vld [vmem:[%s343] ss:$8 sm:$0x3]
    %v386 = vmax.f32 %v383, 1.0
    %vm387 = vcmp.gt.f32.partialorder %v383, 0.0
    %v388 = vrcp.pop %v386
    %v389 = vmul.f32 %v384, %v388
    %v390 = vsel %vm387, %v389, 0.0
    %vm391 = vcmp.gt.f32.partialorder %v383, 1.0
    %v392 = vmul.f32 %v384, %v389
    %v393 = vsub.f32 %v385, %v392
    %v394 = vsub.f32 %v383, 1.0
    %v395 = vmax.f32 %v394, 1.0
    %v396 = vrcp.pop %v395
    %v397 = vmul.f32 %v393, %v396
    %v398 = vsel %vm391, %v397, 0.0
    %v399 = vmax.f32 %v398, 0.0
    %v400 = vrsqrt.pop %v399
    %v401 = vmul.f32 %v399, %v400
    %vm402 = vcmp.eq.f32.partialorder %v399, inf
    %v403 = vsel %vm402, %v399, %v401
    %vm404 = vcmp.eq.f32.partialorder %v399, 0.0
    %v405 = vand.u32 %v399, 2147483648
    %v406 = vsel %vm404, %v405, %v403
    %vm407 = vcmp.ne.f32.partialorder %v390, %v390
    %v408 = vsel %vm407, 0.0, %v390
    %409 = vst.msk [vmem:[%s2] ss:$8 sm:$0x3] %vm305, %v408
    %410 = vst.msk [vmem:[%s2] ss:$8 sm:$0x0] %vm305, %v408
    %vm411 = vcmp.ne.f32.partialorder %v406, %v406
    %v412 = vsel %vm411, 0.0, %v406
    %s413 = scalar_lea.vmem %s2, 1
    %414 = vst.msk [vmem:[%s413] ss:$8 sm:$0x3] %vm305, %v412
    %415 = vst.msk [vmem:[%s413] ss:$8 sm:$0x0] %vm305, %v412
  $region17: #{feature_gen.1} parent=0 // pred_fallthru
    _
  // Predicated region
  $region18: #{feature_gen.1} parent=0 // pred_check
    _
  $region19: #{feature_gen.1} parent=0 // pred_check_branch
    %417 = sbr.rel (0) target = $region21
  $region20: #{feature_gen.1} parent=0 // pred_region
    _
  $region21: #{feature_gen.1} parent=0 // pred_fallthru
    _
  // Predicated region
  $region22: #{feature_gen.1} parent=0 // pred_check
    _
  $region23: #{feature_gen.1} parent=0 // pred_check_branch
    %419 = sbr.rel (0) target = $region25
  $region24: #{feature_gen.1} parent=0 // pred_region
    _
  $region25: #{feature_gen.1} parent=0 // pred_fallthru
    _

</llo_original>
